<compile_context>
chip_gen: v6e
topology: v6e:2x2x1
jax: 0.10.0
libtpu: 0.0.40
codegen_flags: <defaults>
</compile_context>

<pallas_src>
import functools

import jax
import jax.numpy as jnp
from jax import lax
from jax.experimental import pallas as pl
from jax.experimental.pallas import tpu as pltpu


def _round_up(v, m):
    return (v + m - 1) // m * m


# ---------------------------------------------------------------------------
# Phase A: streaming global-average-pool reduction + 1x1 conv + BN + ReLU.
# ---------------------------------------------------------------------------
def _aspp_reduce_kernel(x_ref, w_ref, shift_ref, y_ref, acc_ref, *, hw, hw_tile):
    # x_ref:     (N, Cin, hw_tile)  current spatial tile
    # w_ref:     (Cin, Cout)        conv weight with (bn_scale / HW) folded in
    # shift_ref: (1, Cout)          bn_beta - bn_mean * bn_scale
    # y_ref:     (N, Cout)          tiny output, written on the last step only
    # acc_ref:   (N, Cin) f32 VMEM  running spatial sum
    step = pl.program_id(0)

    @pl.when(step == 0)
    def _init():
        acc_ref[...] = jnp.zeros_like(acc_ref)

    x = x_ref[...].astype(jnp.float32)
    if hw % hw_tile != 0:
        # Ragged boundary tile: out-of-bounds lanes hold unspecified data.
        # Mask them to zero (cheap VPU select; the kernel is HBM-bound).
        lane = lax.broadcasted_iota(jnp.int32, x.shape, x.ndim - 1)
        x = jnp.where(step * hw_tile + lane < hw, x, 0.0)

    # Per-tile partial sum over the spatial (lane) axis, accumulated in f32.
    acc_ref[...] += jnp.sum(x, axis=-1)

    @pl.when(step == pl.num_programs(0) - 1)
    def _finalize():
        # 1/HW and BN scale are already folded into w's columns, so this single
        # matmul is  mean_pool(x) @ conv_w.T * bn_scale.
        y = jnp.dot(acc_ref[...], w_ref[...],
                    preferred_element_type=jnp.float32)        # (N, Cout)
        y = y + shift_ref[...]                                 # BN shift
        y_ref[...] = jnp.maximum(y, 0.0)                       # ReLU


# ---------------------------------------------------------------------------
# Phase B: broadcast (N, Cout) over HW with lane-dense stores.
# ---------------------------------------------------------------------------
def _aspp_broadcast_kernel(y_ref, o_ref):
    # y_ref: (N, Cout, 1) — same block index every step, so it stays resident
    # in VMEM; broadcasting along the lane (last) axis is a cheap splat.
    o_ref[...] = jnp.broadcast_to(y_ref[...], o_ref.shape).astype(o_ref.dtype)


def aspp_pooling(x, conv_weight, bn_gamma, bn_beta, bn_mean, bn_var,
                 eps=1e-5, reduce_tile=512, bcast_tile=1024):
    """x: (N, Cin, H, W) NCHW.  conv_weight: (Cout, Cin, 1, 1)."""
    N, Cin, H, W = x.shape
    Cout = conv_weight.shape[0]
    HW = H * W
    itemsize = jnp.dtype(x.dtype).itemsize

    # ---- parameter folding (plain JAX glue) -------------------------------
    inv_std = 1.0 / jnp.sqrt(bn_var.astype(jnp.float32) + eps)
    scale = bn_gamma.astype(jnp.float32) * inv_std                    # (Cout,)
    # Fold BN scale and the 1/HW of the mean into the conv weight columns.
    w = (conv_weight.reshape(Cout, Cin).T.astype(jnp.float32)
         * (scale / HW)[None, :])                                     # (Cin, Cout)
    shift = (bn_beta.astype(jnp.float32)
             - bn_mean.astype(jnp.float32) * scale)[None, :]          # (1, Cout)

    # ---- phase A: reduction over HW tiles ----------------------------------
    # Cap the (double-buffered) input block at ~8 MiB so large Cin still fits
    # comfortably inside the scoped-VMEM budget.
    bytes_per_hw_col = max(1, N * Cin * itemsize)
    fit_tile_a = max(128, ((8 * 1024 * 1024) // bytes_per_hw_col) // 128 * 128)
    hw_tile_a = min(_round_up(HW, 128), _round_up(reduce_tile, 128), fit_tile_a)
    grid_a = pl.cdiv(HW, hw_tile_a)

    x_flat = x.reshape(N, Cin, HW)

    reduce_cost = pl.CostEstimate(
        flops=int(N * Cin * HW + 2 * N * Cin * Cout),
        transcendentals=0,
        bytes_accessed=int(N * Cin * HW * itemsize
                           + Cin * Cout * 4 + Cout * 4 + N * Cout * 4),
    )

    reduce_kernel = functools.partial(_aspp_reduce_kernel, hw=HW, hw_tile=hw_tile_a)
    y = pl.pallas_call(
        reduce_kernel,
        out_shape=jax.ShapeDtypeStruct((N, Cout), jnp.float32),
        grid=(grid_a,),
        in_specs=[
            pl.BlockSpec((N, Cin, hw_tile_a), lambda i: (0, 0, i)),
            pl.BlockSpec((Cin, Cout), lambda i: (0, 0)),
            pl.BlockSpec((1, Cout), lambda i: (0, 0)),
        ],
        out_specs=pl.BlockSpec((N, Cout), lambda i: (0, 0)),
        scratch_shapes=[pltpu.VMEM((N, Cin), jnp.float32)],
        compiler_params=pltpu.CompilerParams(
            dimension_semantics=("arbitrary",),
            vmem_limit_bytes=32 * 1024 * 1024),
        cost_estimate=reduce_cost,
    )(x_flat, w, shift)

    # ---- phase B: lane-dense broadcast to (N, Cout, HW) ---------------------
    bytes_per_out_col = max(1, N * Cout * itemsize)
    fit_tile_b = max(128, ((8 * 1024 * 1024) // bytes_per_out_col) // 128 * 128)
    hw_tile_b = min(_round_up(HW, 128), _round_up(bcast_tile, 128), fit_tile_b)
    grid_b = pl.cdiv(HW, hw_tile_b)

    bcast_cost = pl.CostEstimate(
        flops=0,
        transcendentals=0,
        bytes_accessed=int(N * Cout * 4 + N * Cout * HW * itemsize),
    )

    out_flat = pl.pallas_call(
        _aspp_broadcast_kernel,
        out_shape=jax.ShapeDtypeStruct((N, Cout, HW), x.dtype),
        grid=(grid_b,),
        in_specs=[pl.BlockSpec((N, Cout, 1), lambda j: (0, 0, 0))],
        out_specs=pl.BlockSpec((N, Cout, hw_tile_b), lambda j: (0, 0, j)),
        compiler_params=pltpu.CompilerParams(
            dimension_semantics=("parallel",),
            vmem_limit_bytes=32 * 1024 * 1024),
        cost_estimate=bcast_cost,
    )(y.reshape(N, Cout, 1))

    return out_flat.reshape(N, Cout, H, W)


def _reference(x, conv_weight, bn_gamma, bn_beta, bn_mean, bn_var, eps=1e-5):
    """Pure-JAX reference for a correctness check."""
    N, Cin, H, W = x.shape
    Cout = conv_weight.shape[0]
    pooled = jnp.mean(x.astype(jnp.float32), axis=(2, 3))              # (N, Cin)
    y = pooled @ conv_weight.reshape(Cout, Cin).T.astype(jnp.float32)  # (N, Cout)
    inv_std = 1.0 / jnp.sqrt(bn_var + eps)
    y = (y - bn_mean) * inv_std * bn_gamma + bn_beta
    y = jnp.maximum(y, 0.0)
    return jnp.broadcast_to(y[:, :, None, None], (N, Cout, H, W)).astype(x.dtype)


if __name__ == "__main__":
    key = jax.random.PRNGKey(0)
    k_x, k_w, k_g, k_b, k_m, k_v, k_x2 = jax.random.split(key, 7)

    N, Cin, Cout = 2, 4, 8

    conv_weight = jax.random.normal(k_w, (Cout, Cin, 1, 1), dtype=jnp.float32) * 0.1
    bn_gamma = 1.0 + 0.1 * jax.random.normal(k_g, (Cout,), dtype=jnp.float32)
    bn_beta = 0.1 * jax.random.normal(k_b, (Cout,), dtype=jnp.float32)
    bn_mean = 0.05 * jax.random.normal(k_m, (Cout,), dtype=jnp.float32)
    bn_var = jnp.abs(1.0 + 0.1 * jax.random.normal(k_v, (Cout,), dtype=jnp.float32))

    # Test 1: HW divisible by 128 (16x16); small tiles force a multi-step
    # reduction pipeline and a multi-step broadcast.
    H, W = 16, 16
    x = jax.random.normal(k_x, (N, Cin, H, W), dtype=jnp.float32)
    out = aspp_pooling(x, conv_weight, bn_gamma, bn_beta, bn_mean, bn_var,
                       reduce_tile=128, bcast_tile=128)
    out = jax.block_until_ready(out)
    ref = _reference(x, conv_weight, bn_gamma, bn_beta, bn_mean, bn_var)
    assert out.shape == (N, Cout, H, W)
    assert jnp.allclose(out, ref, atol=1e-5, rtol=1e-5), "mismatch (divisible HW)"

    # Test 2: ragged HW (9x9 = 81) exercising the in-kernel mask and the
    # partially-written boundary output block.
    H2, W2 = 9, 9
    x2 = jax.random.normal(k_x2, (N, Cin, H2, W2), dtype=jnp.float32)
    out2 = aspp_pooling(x2, conv_weight, bn_gamma, bn_beta, bn_mean, bn_var)
    out2 = jax.block_until_ready(out2)
    ref2 = _reference(x2, conv_weight, bn_gamma, bn_beta, bn_mean, bn_var)
    assert out2.shape == (N, Cout, H2, W2)
    assert jnp.allclose(out2, ref2, atol=1e-5, rtol=1e-5), "mismatch (ragged HW)"

    print("KERNEL_OK")
</pallas_src>

<mosaic_0001>
module attributes {stable_mosaic.version = 11 : i64} {
  func.func @_aspp_reduce_kernel(%arg0: i32, %arg1: memref<2x4x128xf32, #tpu.memory_space<vmem>>, %arg2: memref<4x8xf32, #tpu.memory_space<vmem>>, %arg3: memref<1x8xf32, #tpu.memory_space<vmem>>, %arg4: memref<2x8xf32, #tpu.memory_space<vmem>>, %arg5: memref<2x4xf32, #tpu.memory_space<vmem>>) attributes {dimension_semantics = [#tpu.dimension_semantics<arbitrary>], iteration_bounds = array<i64: 2>, scalar_prefetch = 0 : i64, scratch_operands = 1 : i64, tpu.core_type = #tpu.core_type<tc>, window_params = [{transform_indices = @transform_0, window_bounds = array<i64: 2, 4, 128>}, {pipeline_mode = #tpu.pipeline_mode<synchronous>, transform_indices = @transform_1, window_bounds = array<i64: 4, 8>}, {pipeline_mode = #tpu.pipeline_mode<synchronous>, transform_indices = @transform_2, window_bounds = array<i64: 1, 8>}, {pipeline_mode = #tpu.pipeline_mode<synchronous>, transform_indices = @transform_3, window_bounds = array<i64: 2, 8>}]} {
    %c0_i32 = arith.constant 0 : i32
    %0 = arith.cmpi eq, %arg0, %c0_i32 : i32
    %1 = arith.extui %0 : i1 to i32
    %c0_i32_0 = arith.constant 0 : i32
    %2 = arith.cmpi ne, %1, %c0_i32_0 : i32
    scf.if %2 {
      %cst_8 = arith.constant 0.000000e+00 : f32
      %11 = vector.broadcast %cst_8 : f32 to vector<2x4xf32>
      %c0_9 = arith.constant 0 : index
      %c0_10 = arith.constant 0 : index
      %12 = vector.load %arg5[%c0_9, %c0_10] : memref<2x4xf32, #tpu.memory_space<vmem>>, vector<2x4xf32>
      tpu.vector_store %arg5[%c0_9, %c0_10], %11 {strides = array<i32>} : memref<2x4xf32, #tpu.memory_space<vmem>>, vector<2x4xf32>,
    } else {
    }
    %c0 = arith.constant 0 : index
    %c0_1 = arith.constant 0 : index
    %c0_2 = arith.constant 0 : index
    %3 = vector.load %arg1[%c0, %c0_1, %c0_2] : memref<2x4x128xf32, #tpu.memory_space<vmem>>, vector<2x4x128xf32>
    %c0_3 = arith.constant 0 : index
    %c0_4 = arith.constant 0 : index
    %4 = vector.load %arg5[%c0_3, %c0_4] : memref<2x4xf32, #tpu.memory_space<vmem>>, vector<2x4xf32>
    %cst = arith.constant dense<0.000000e+00> : vector<2x4xf32>
    %5 = vector.multi_reduction <add>, %3, %cst [2] : vector<2x4x128xf32> to vector<2x4xf32>
    %6 = arith.addf %4, %5 : vector<2x4xf32>
    %c0_5 = arith.constant 0 : index
    %c0_6 = arith.constant 0 : index
    %7 = vector.load %arg5[%c0_5, %c0_6] : memref<2x4xf32, #tpu.memory_space<vmem>>, vector<2x4xf32>
    tpu.vector_store %arg5[%c0_5, %c0_6], %6 {strides = array<i32>} : memref<2x4xf32, #tpu.memory_space<vmem>>, vector<2x4xf32>,
    %c1_i32 = arith.constant 1 : i32
    %8 = arith.cmpi eq, %arg0, %c1_i32 : i32
    %9 = arith.extui %8 : i1 to i32
    %c0_i32_7 = arith.constant 0 : i32
    %10 = arith.cmpi ne, %9, %c0_i32_7 : i32
    scf.if %10 {
      %c0_8 = arith.constant 0 : index
      %c0_9 = arith.constant 0 : index
      %11 = vector.load %arg5[%c0_8, %c0_9] : memref<2x4xf32, #tpu.memory_space<vmem>>, vector<2x4xf32>
      %c0_10 = arith.constant 0 : index
      %c0_11 = arith.constant 0 : index
      %12 = vector.load %arg2[%c0_10, %c0_11] : memref<4x8xf32, #tpu.memory_space<vmem>>, vector<4x8xf32>
      %cst_12 = arith.constant dense<0.000000e+00> : vector<2x8xf32>
      %13 = tpu.matmul %11, %12, %cst_12 {dimension_numbers = #tpu.dot_dimension_numbers<[1], [0], [0], [1], [0, 0, 1, 1], [], []>} : vector<2x4xf32>, vector<4x8xf32>, vector<2x8xf32> -> vector<2x8xf32>
      %c0_13 = arith.constant 0 : index
      %c0_14 = arith.constant 0 : index
      %14 = vector.load %arg3[%c0_13, %c0_14] : memref<1x8xf32, #tpu.memory_space<vmem>>, vector<1x8xf32>
      %15 = vector.broadcast %14 : vector<1x8xf32> to vector<2x8xf32>
      %16 = arith.addf %13, %15 : vector<2x8xf32>
      %cst_15 = arith.constant 0.000000e+00 : f32
      %17 = vector.broadcast %cst_15 : f32 to vector<2x8xf32>
      %18 = arith.maximumf %16, %17 : vector<2x8xf32>
      %c0_16 = arith.constant 0 : index
      %c0_17 = arith.constant 0 : index
      %19 = vector.load %arg4[%c0_16, %c0_17] : memref<2x8xf32, #tpu.memory_space<vmem>>, vector<2x8xf32>
      tpu.vector_store %arg4[%c0_16, %c0_17], %18 {strides = array<i32>} : memref<2x8xf32, #tpu.memory_space<vmem>>, vector<2x8xf32>,
    } else {
    }
    return
  }
  func.func @transform_0(%arg0: i32) -> (i32, i32, i32) {
    %c0_i32 = arith.constant 0 : i32
    %c0_i32_0 = arith.constant 0 : i32
    %c0_i32_1 = arith.constant 0 : i32
    return %c0_i32, %c0_i32_0, %arg0 : i32, i32, i32
  }
  func.func @transform_1(%arg0: i32) -> (i32, i32) {
    %c0_i32 = arith.constant 0 : i32
    %c0_i32_0 = arith.constant 0 : i32
    %c0_i32_1 = arith.constant 0 : i32
    return %c0_i32, %c0_i32_0 : i32, i32
  }
  func.func @transform_2(%arg0: i32) -> (i32, i32) {
    %c0_i32 = arith.constant 0 : i32
    %c0_i32_0 = arith.constant 0 : i32
    %c0_i32_1 = arith.constant 0 : i32
    return %c0_i32, %c0_i32_0 : i32, i32
  }
  func.func @transform_3(%arg0: i32) -> (i32, i32) {
    %c0_i32 = arith.constant 0 : i32
    %c0_i32_0 = arith.constant 0 : i32
    %c0_i32_1 = arith.constant 0 : i32
    return %c0_i32, %c0_i32_0 : i32, i32
  }
}

</mosaic_0001>

<llo_original>
// kernel: tpu_custom_call.1
$region0: #{tpu_custom_call.1}
  #allocation0 [shape = 'u32[]', space=smem, size = 0x4, offset = 0x4, fixed_abs, tag = 'smem constant byte address 0x4 - core index']
  #allocation1 [shape = 'u32[144,128]{1,0:T(1,128)}', space=vmem, size = 0x12000, scoped, tag = 'internal scratch']
  #allocation2 [shape = 'f32[2,4]{1,0:T(2,128)}', space=vmem, size = 0x400, scoped, tag = 'scratch operand']
  %s0 = inlined_call_operand.hbm [shape: f32[2,4,256], index: 0, kind: input, shape index: {}]
  %s1 = inlined_call_operand.hbm [shape: f32[4,8], index: 1, kind: input, shape index: {}]
  %s2 = inlined_call_operand.vmem [shape: f32[1,8], index: 2, kind: input, shape index: {}]
  %s3 = inlined_call_operand.hbm [shape: f32[2,8], index: 3, kind: output, shape index: {}]
  %s4 = sld [smem:[#allocation0]]
  $region61: #{tpu_custom_call.1} parent=0
    _
  %s6 = ssub.s32 1, %s4
  %s7 = scalar_select 0, %s6, %s4
  $region1: #{tpu_custom_call.1} parent=0
    #allocation3 [shape = 'u8[8192]{0}', space=vmem, size = 0x2000, scoped, tag = 'input window, operand 0']
    #allocation4 [shape = 's32[2]{0}', space=sflag, size = 0x8, scoped, tag = 'scoped memory for tpu_custom_call.1']
    #allocation5 [shape = 's32[2]{0}', space=sflag, size = 0x8, scoped, tag = 'scoped memory for tpu_custom_call.1']
    #allocation6 [shape = 'u8[2048]{0}', space=vmem, size = 0x800, scoped, tag = 'input window, operand 1, single buffered']
    #allocation7 [shape = 's32[1]{0}', space=sflag, size = 0x4, scoped, tag = 'scoped memory for tpu_custom_call.1']
    #allocation8 [shape = 'u8[1024]{0}', space=vmem, size = 0x400, scoped, tag = 'output window, operand 0, single buffered']
    %8 = vsyncpa [#allocation4], 0
    %s9 = scalar_lea.sflag [#allocation4], 1
    %10 = vsyncpa %s9, 0
    %11 = vsyncpa [#allocation7], 0
    %12 = vsyncpa [#allocation5], 0
    loop: start=0, step=1, limit=4
    $region2: #{tpu_custom_call.1} parent=1 // loop_pre_header
      _
    $region3: #{tpu_custom_call.1} parent=1 // loop_header
      %s14 = sphi 0, %s18
      %p15 = scmp.ge.s32.totalorder %s14, 4
      %s24 = sphi 0, %s26
      %s27 = sphi 0, %s24
      %s28 = sphi 0, %s27
      %s44 = sphi 0, %s28
      %s48 = sphi 0, %s48
      %s50 = sphi 0, %s48
      %s51 = sphi 0, %s50
      %s65 = sphi 0, %s51
      %s69 = sphi 0, %s69
      %s71 = sphi 0, %s69
      %s72 = sphi 0, %s71
      %s86 = sphi 0, %s72
      %s90 = sphi 0, %s90
      %s92 = sphi 0, %s90
      %s93 = sphi 0, %s92
      %s107 = sphi 0, %s93
    $region4: #{tpu_custom_call.1} parent=1 // loop_header_branch
      %17 = sbr.rel (%p15) target = $region8
    $region5: #{tpu_custom_call.1} parent=1 // loop_body
      %s19 = ssub.s32 %s14, 1
      %s20 = ssub.s32 %s14, 2
      %s21 = sadd.s32 %s14, 1
      %s22 = ssub.s32 %s14, %s21
      %p23 = scmp.eq.s32.totalorder %s22, 0
      %s25 = sadd.s32 %s24, 1
      %s26 = scalar_select %p23, %s24, %s25
      %p29 = pneg %p23
      %p30 = scmp.eq.s32.totalorder %s14, 1
      %p31 = por %p29, %p30
      %p32 = scmp.ne.s32.totalorder %s24, %s27
      %p33 = scmp.eq.s32.totalorder %s14, 0
      %p34 = por %p32, %p33
      %p35 = scmp.ne.s32.totalorder %s24, %s27
      %p36 = scmp.eq.s32.totalorder %s19, 1
      %p37 = por %p35, %p36
      %p38 = scmp.ne.s32.totalorder %s27, %s28
      %p39 = scmp.eq.s32.totalorder %s19, 0
      %p40 = por %p38, %p39
      %p41 = scmp.ne.s32.totalorder %s27, %s28
      %p42 = scmp.eq.s32.totalorder %s20, 1
      %p43 = por %p41, %p42
      %p45 = scmp.ne.s32.totalorder %s28, %s44
      %p46 = scmp.eq.s32.totalorder %s20, 0
      %p47 = por %p45, %p46
      %s49 = sadd.s32 %s48, 1
      %p52 = scmp.eq.s32.totalorder %s14, 1
      %p53 = scmp.ne.s32.totalorder %s48, %s50
      %p54 = scmp.eq.s32.totalorder %s14, 0
      %p55 = por %p53, %p54
      %p56 = scmp.ne.s32.totalorder %s48, %s50
      %p57 = scmp.eq.s32.totalorder %s19, 1
      %p58 = por %p56, %p57
      %p59 = scmp.ne.s32.totalorder %s50, %s51
      %p60 = scmp.eq.s32.totalorder %s19, 0
      %p61 = por %p59, %p60
      %p62 = scmp.ne.s32.totalorder %s50, %s51
      %p63 = scmp.eq.s32.totalorder %s20, 1
      %p64 = por %p62, %p63
      %p66 = scmp.ne.s32.totalorder %s51, %s65
      %p67 = scmp.eq.s32.totalorder %s20, 0
      %p68 = por %p66, %p67
      %s70 = sadd.s32 %s69, 1
      %p73 = scmp.eq.s32.totalorder %s14, 1
      %p74 = scmp.ne.s32.totalorder %s69, %s71
      %p75 = scmp.eq.s32.totalorder %s14, 0
      %p76 = por %p74, %p75
      %p77 = scmp.ne.s32.totalorder %s69, %s71
      %p78 = scmp.eq.s32.totalorder %s19, 1
      %p79 = por %p77, %p78
      %p80 = scmp.ne.s32.totalorder %s71, %s72
      %p81 = scmp.eq.s32.totalorder %s19, 0
      %p82 = por %p80, %p81
      %p83 = scmp.ne.s32.totalorder %s71, %s72
      %p84 = scmp.eq.s32.totalorder %s20, 1
      %p85 = por %p83, %p84
      %p87 = scmp.ne.s32.totalorder %s72, %s86
      %p88 = scmp.eq.s32.totalorder %s20, 0
      %p89 = por %p87, %p88
      %s91 = sadd.s32 %s90, 1
      %p94 = scmp.eq.s32.totalorder %s14, 1
      %p95 = scmp.ne.s32.totalorder %s90, %s92
      %p96 = scmp.eq.s32.totalorder %s14, 0
      %p97 = por %p95, %p96
      %p98 = scmp.ne.s32.totalorder %s90, %s92
      %p99 = scmp.eq.s32.totalorder %s19, 1
      %p100 = por %p98, %p99
      %p101 = scmp.ne.s32.totalorder %s92, %s93
      %p102 = scmp.eq.s32.totalorder %s19, 0
      %p103 = por %p101, %p102
      %p104 = scmp.ne.s32.totalorder %s92, %s93
      %p105 = scmp.eq.s32.totalorder %s20, 1
      %p106 = por %p104, %p105
      %p108 = scmp.ne.s32.totalorder %s93, %s107
      %p109 = scmp.eq.s32.totalorder %s20, 0
      %p110 = por %p108, %p109
      %p111 = scmp.le.s32.totalorder 1, %s14
      %p112 = scmp.lt.s32.totalorder %s14, 3
      %p113 = pnand %p111, %p112
      %p114 = pneg %p113
      // Predicated region
      $region9: #{tpu_custom_call.1} parent=5 // pred_check
        _
      $region10: #{tpu_custom_call.1} parent=5 // pred_check_branch
        %116 = sbr.rel (%p113) target = $region12
      $region11: #{tpu_custom_call.1} parent=5 // pred_region
        %s117 = ssub.s32 %s14, 1
        // Predicated region
        $region13: #{tpu_custom_call.1} parent=11 // pred_check
          %p118 = pneg %p61
        $region14: #{tpu_custom_call.1} parent=11 // pred_check_branch
          %120 = sbr.rel (%p118) target = $region16
        $region15: #{tpu_custom_call.1} parent=11 // pred_region
          %s122 = ssub.s32 64, 64
          %123 = vsyncadd [#allocation7], %s122
          %s125 = sshll.u32 [#allocation6], 4
          %s126 = int_to_ptr.vmem [resolvable:$true] %s125
          %128 = dma.hbm_to_vmem [thread:$0]  %s1, 64, %s126, [#allocation7]
        $region16: #{tpu_custom_call.1} parent=11 // pred_fallthru
          _
        // Predicated region
        $region17: #{tpu_custom_call.1} parent=11 // pred_check
          %p129 = pneg %p82
        $region18: #{tpu_custom_call.1} parent=11 // pred_check_branch
          %131 = sbr.rel (%p129) target = $region20
        $region19: #{tpu_custom_call.1} parent=11 // pred_region
          _
        $region20: #{tpu_custom_call.1} parent=11 // pred_fallthru
          _
      $region12: #{tpu_custom_call.1} parent=5 // pred_fallthru
        _
      %p132 = scmp.lt.s32.totalorder %s14, 2
      // Predicated region
      $region21: #{tpu_custom_call.1} parent=5 // pred_check
        %p133 = pneg %p132
      $region22: #{tpu_custom_call.1} parent=5 // pred_check_branch
        %135 = sbr.rel (%p133) target = $region24
      $region23: #{tpu_custom_call.1} parent=5 // pred_region
        // Predicated region
        $region25: #{tpu_custom_call.1} parent=23 // pred_check
          %p136 = pneg %p34
        $region26: #{tpu_custom_call.1} parent=23 // pred_check_branch
          %138 = sbr.rel (%p136) target = $region28
        $region27: #{tpu_custom_call.1} parent=23 // pred_region
          %s139 = sand.u32 %s24, 1
          %s140 = scalar_lea.sflag [#allocation4], %s139
          %s141 = sand.u32 %s24, 1
          %s142 = smul.addr %s141, 8
          %s143 = scalar_lea.vmem [#allocation3], %s142
          %s145 = ssub.s32 128, 128
          %146 = vsyncadd %s140, %s145
          %s147 = smul.addr %s14, 64
          %s148 = scalar_lea.hbm %s0, %s147
          %s149 = sshll.u32 %s143, 4
          %s150 = int_to_ptr.vmem [resolvable:$true] %s149
          %155 = dma.hbm_to_vmem [thread:$0]  %s148, 128, %s150, %s140, 128, 64, 4
        $region28: #{tpu_custom_call.1} parent=23 // pred_fallthru
          _
      $region24: #{tpu_custom_call.1} parent=5 // pred_fallthru
        _
      %p156 = scmp.le.s32.totalorder 1, %s14
      %p157 = scmp.lt.s32.totalorder %s14, 3
      %p158 = pnand %p156, %p157
      %p159 = pneg %p158
      // Predicated region
      $region29: #{tpu_custom_call.1} parent=5 // pred_check
        _
      $region30: #{tpu_custom_call.1} parent=5 // pred_check_branch
        %161 = sbr.rel (%p158) target = $region32
      $region31: #{tpu_custom_call.1} parent=5 // pred_region
        %s162 = ssub.s32 %s14, 1
        %s163 = sand.u32 %s27, 1
        %s164 = scalar_lea.sflag [#allocation4], %s163
        %s165 = sand.u32 %s27, 1
        %s166 = smul.addr %s165, 8
        %s167 = scalar_lea.vmem [#allocation3], %s166
        // Predicated region
        $region33: #{tpu_custom_call.1} parent=31 // pred_check
          %p168 = pneg %p40
        $region34: #{tpu_custom_call.1} parent=31 // pred_check_branch
          %170 = sbr.rel (%p168) target = $region36
        $region35: #{tpu_custom_call.1} parent=31 // pred_region
          %171 = dma.done %s164, 128
        $region36: #{tpu_custom_call.1} parent=31 // pred_fallthru
          _
        // Predicated region
        $region37: #{tpu_custom_call.1} parent=31 // pred_check
          %p172 = pneg %p61
        $region38: #{tpu_custom_call.1} parent=31 // pred_check_branch
          %174 = sbr.rel (%p172) target = $region40
        $region39: #{tpu_custom_call.1} parent=31 // pred_region
          %175 = dma.done [#allocation7], 64
        $region40: #{tpu_custom_call.1} parent=31 // pred_fallthru
          _
        %s176 = sand.u32 %s27, 1
        %s177 = scalar_lea.sflag [#allocation4], %s176
        %s178 = sand.u32 %s27, 1
        %s179 = smul.addr %s178, 8
        %s180 = scalar_lea.vmem [#allocation3], %s179
        %p181 = pneg %p40
        %p182 = pneg %p37
        %p183 = pneg %p61
        %p184 = pneg %p58
        %p185 = pneg %p82
        %p186 = pneg %p79
        %p187 = pneg %p103
        %p188 = pneg %p100
        %p189 = scmp.eq.s32.totalorder %s19, 0
        // Predicated region
        $region41: #{tpu_custom_call.1} parent=31 // pred_check
          %p190 = pneg %p189
        $region42: #{tpu_custom_call.1} parent=31 // pred_check_branch
          %192 = sbr.rel (%p190) target = $region44
        $region43: #{tpu_custom_call.1} parent=31 // pred_region
          %vm193 = vcmask 25600
          %194 = vst.msk [vmem:[#allocation2] sm:$0x3] %vm193, 0.0
        $region44: #{tpu_custom_call.1} parent=31 // pred_fallthru
          _
        %v195 = vld [vmem:[%s167] sm:$0xf]
        %v196 = vld [vmem:[%s167 + $0x4] sm:$0xf]
        %v197 = vld [vmem:[#allocation2] sm:$0x3]
        %vm198 = vcmask 1043456
        %v199 = vsel %vm198, %v195, 0.0
        %200 = vadd.xlane.f32.xlu0 %v199
        %v201 = vpop.xlane.xlu0 %200
        %v202 = vsel %vm198, %v196, 0.0
        %203 = vadd.xlane.f32.xlu0 %v202
        %v204 = vpop.xlane.xlu0 %203
        %v207 = vlaneseq
        %v208 = vand.u32 %v207, 127
        %v209 = vlaneseq
        %v210 = vshrl.u32 %v209, 7
        %v211 = vsub.s32 %v208, %v210
        %v212 = vrot.slane %v201, %v211
        %v213 = vlaneseq
        %v214 = vshrl.u32 %v213, 7
        %v215 = vsub.s32 %v208, %v214
        %v216 = vrot.slane %v204, %v215
        %vm217 = vcmask 1041409
        %v218 = vsel %vm217, %v216, %v212
        %v220 = vadd.f32 %v197, %v218
        %vm221 = vcmask 25600
        %222 = vst.msk [vmem:[#allocation2] sm:$0x3] %vm221, %v220
        %p223 = scmp.eq.s32.totalorder %s19, 1
        // Predicated region
        $region45: #{tpu_custom_call.1} parent=31 // pred_check
          %p224 = pneg %p223
        $region46: #{tpu_custom_call.1} parent=31 // pred_check_branch
          %226 = sbr.rel (%p224) target = $region48
        $region47: #{tpu_custom_call.1} parent=31 // pred_region
          %v227 = vld [vmem:[#allocation2] sm:$0x3]
          %v228 = vld [vmem:[#allocation6] sm:$0xf]
          %v229 = vld [vmem:[%s2] sm:$0x1]
          %v231 = vlaneseq
          %v232 = vshrl.u32 %v231, 7
          %v233 = vsub.s32 0, %v232
          %v234 = vrot.slane %v229, %v233
          %vm236 = vcmask 31744
          %v238 = vsel %vm236, %v227, 0
          %v241 = vsel %vm198, %v228, 0
          %243 = vmatprep.subr.mxu0 0.0
          %244 = vmatpush1.msra.mxu0 0.0
          %245 = vmatprep.subr.mxu0 0.0
          %246 = vmatpush1.msra.mxu0 0.0
          %247 = vmatprep.subr.mxu0 0.0
          %248 = vmatpush1.msra.mxu0 0.0
          %249 = vmatprep.subr.mxu0 0.0
          %250 = vmatpush1.msra.mxu0 0.0
          %251 = vmatprep.subr.mxu0 0.0
          %252 = vmatpush1.msra.mxu0 0.0
          %253 = vmatprep.subr.mxu0 0.0
          %254 = vmatpush1.msra.mxu0 0.0
          %255 = vmatprep.subr.mxu0 0.0
          %256 = vmatpush1.msra.mxu0 0.0
          %257 = vmatprep.subr.mxu0 0.0
          %258 = vmatpush1.msra.mxu0 0.0
          %259 = vmatprep.subr.mxu0 0.0
          %260 = vmatpush1.msra.mxu0 0.0
          %261 = vmatprep.subr.mxu0 0.0
          %262 = vmatpush1.msra.mxu0 0.0
          %263 = vmatprep.subr.mxu0 0.0
          %264 = vmatpush1.msra.mxu0 0.0
          %265 = vmatprep.subr.mxu0 0.0
          %266 = vmatpush1.msra.mxu0 0.0
          %267 = vmatprep.subr.mxu0 0.0
          %268 = vmatpush1.msra.mxu0 0.0
          %269 = vmatprep.subr.mxu0 0.0
          %270 = vmatpush1.msra.mxu0 0.0
          %271 = vmatprep.subr.mxu0 0.0
          %272 = vmatpush1.msra.mxu0 0.0
          %273 = vmatprep.subr.mxu0 0.0
          %274 = vmatpush1.msra.mxu0 %v241
          %275 = vmatprep.subr.mxu0 0.0
          %276 = vmatpush2.msra.mxu0 0.0
          %277 = vmatprep.subr.mxu0 0.0
          %278 = vmatpush2.msra.mxu0 0.0
          %279 = vmatprep.subr.mxu0 0.0
          %280 = vmatpush2.msra.mxu0 0.0
          %281 = vmatprep.subr.mxu0 0.0
          %282 = vmatpush2.msra.mxu0 0.0
          %283 = vmatprep.subr.mxu0 0.0
          %284 = vmatpush2.msra.mxu0 0.0
          %285 = vmatprep.subr.mxu0 0.0
          %286 = vmatpush2.msra.mxu0 0.0
          %287 = vmatprep.subr.mxu0 0.0
          %288 = vmatpush2.msra.mxu0 0.0
          %289 = vmatprep.subr.mxu0 0.0
          %290 = vmatpush2.msra.mxu0 0.0
          %291 = vmatprep.subr.mxu0 0.0
          %292 = vmatpush2.msra.mxu0 0.0
          %293 = vmatprep.subr.mxu0 0.0
          %294 = vmatpush2.msra.mxu0 0.0
          %295 = vmatprep.subr.mxu0 0.0
          %296 = vmatpush2.msra.mxu0 0.0
          %297 = vmatprep.subr.mxu0 0.0
          %298 = vmatpush2.msra.mxu0 0.0
          %299 = vmatprep.subr.mxu0 0.0
          %300 = vmatpush2.msra.mxu0 0.0
          %301 = vmatprep.subr.mxu0 0.0
          %302 = vmatpush2.msra.mxu0 0.0
          %303 = vmatprep.subr.mxu0 0.0
          %304 = vmatpush2.msra.mxu0 0.0
          %305 = vmatprep.subr.mxu0 0.0
          %306 = vmatpush2.msra.mxu0 0.0
          %307 = vmatprep.mubr.f32.mxu0 0.0
          %308 = vmatmul.mubr.f32.gmra.mxu0 %v238
          %v309 = vpop.f32.mrf.mxu0
          %v310 = vadd.f32 %v234, %v309
          %v311 = vpop.f32.mrf.mxu0
          %312 = vdwg.mxu0
          %v313 = vmax.f32 %v310, 0.0
          %vm314 = vcmask 58368
          %315 = vst.msk [vmem:[#allocation8] sm:$0x3] %vm314, %v313
        $region48: #{tpu_custom_call.1} parent=31 // pred_fallthru
          _
        // Predicated region
        $region49: #{tpu_custom_call.1} parent=31 // pred_check
          %p316 = pneg %p100
        $region50: #{tpu_custom_call.1} parent=31 // pred_check_branch
          %318 = sbr.rel (%p316) target = $region52
        $region51: #{tpu_custom_call.1} parent=31 // pred_region
          %s320 = ssub.s32 32, 32
          %321 = vsyncadd [#allocation5], %s320
          %s323 = sshll.u32 [#allocation8], 4
          %s324 = int_to_ptr.vmem [resolvable:$true] %s323
          %326 = dma.vmem_to_hbm [thread:$0]  %s324, 32, %s3, [#allocation5]
        $region52: #{tpu_custom_call.1} parent=31 // pred_fallthru
          _
        // Predicated region
        $region53: #{tpu_custom_call.1} parent=31 // pred_check
          %p327 = pneg %p100
        $region54: #{tpu_custom_call.1} parent=31 // pred_check_branch
          %329 = sbr.rel (%p327) target = $region56
        $region55: #{tpu_custom_call.1} parent=31 // pred_region
          %330 = dma.done [#allocation5], 32
        $region56: #{tpu_custom_call.1} parent=31 // pred_fallthru
          _
      $region32: #{tpu_custom_call.1} parent=5 // pred_fallthru
        _
      %p331 = scmp.le.s32.totalorder 2, %s14
      // Predicated region
      $region57: #{tpu_custom_call.1} parent=5 // pred_check
        %p332 = pneg %p331
      $region58: #{tpu_custom_call.1} parent=5 // pred_check_branch
        %334 = sbr.rel (%p332) target = $region60
      $region59: #{tpu_custom_call.1} parent=5 // pred_region
        %s335 = ssub.s32 %s14, 2
      $region60: #{tpu_custom_call.1} parent=5 // pred_fallthru
        _
    $region6: #{tpu_custom_call.1} parent=1 // loop_footer
      %s18 = sadd.s32 1, %s14
    $region7: #{tpu_custom_call.1} parent=1 // loop_footer_branch
      %13 = sbr.rel target = $region3
    $region8: #{tpu_custom_call.1} parent=1 // loop_exit
      _
    %336 = vsyncpa [#allocation4], 1
    %s337 = scalar_lea.sflag [#allocation4], 1
    %338 = vsyncpa %s337, 1
    %339 = vsyncpa [#allocation7], 1
    %340 = vsyncpa [#allocation5], 1
    %s341 = scalar_lea.sflag [#allocation5], 1
    %342 = vsyncpa %s341, 1

</llo_original>
